<compile_context>
chip_gen: v6e
topology: v6e:2x2x1
jax: 0.10.0
libtpu: 0.0.40
codegen_flags: <defaults>
</compile_context>

<pallas_src>
import functools
import math

import jax
import jax.numpy as jnp
from jax.experimental import pallas as pl
from jax.experimental.pallas import tpu as pltpu


_LANES = 512          # lane-dense last dim (multiple of 128)
_MAX_TILE_ROWS = 512  # (512, 512) f32 block = 1 MiB -> ~6 MiB pipeline VMEM


def _hardshrink_kernel(t_ref, p_ref, o_ref, *, beta):
    # x = |target - pred|; hardshrink(x, beta) keeps x where x > beta or
    # x < -beta (the latter branch only matters for negative beta, but it is
    # free here: VPU has slack in a memory-bound kernel).
    x = jnp.abs(t_ref[...] - p_ref[...])
    keep = jnp.logical_or(x > beta, x < -beta)
    o_ref[...] = jnp.where(keep, x, jnp.zeros_like(x))


def hardshrink_loss(target, pred, beta=0.01):
    assert target.shape == pred.shape
    assert target.dtype == pred.dtype
    orig_shape = target.shape
    n = math.prod(orig_shape) if len(orig_shape) > 0 else 1

    # Lane-dense 2D slab: (rows, _LANES), padding the tail only if needed.
    cols = _LANES
    rows_raw = -(-n // cols)  # ceil div
    if rows_raw <= _MAX_TILE_ROWS:
        tile_r = rows_raw     # single full-extent block (any row count OK)
        rows = rows_raw
    else:
        tile_r = _MAX_TILE_ROWS
        rows = -(-rows_raw // tile_r) * tile_r

    padded = rows * cols
    t_flat = target.reshape(-1)
    p_flat = pred.reshape(-1)
    if padded != n:
        pad = padded - n
        t_flat = jnp.pad(t_flat, (0, pad))
        p_flat = jnp.pad(p_flat, (0, pad))
    t2 = t_flat.reshape(rows, cols)
    p2 = p_flat.reshape(rows, cols)

    blk = pl.BlockSpec((tile_r, cols), lambda i: (i, 0))

    out2 = pl.pallas_call(
        functools.partial(_hardshrink_kernel, beta=beta),
        out_shape=jax.ShapeDtypeStruct((rows, cols), target.dtype),
        grid=(rows // tile_r,),
        in_specs=[blk, blk],
        out_specs=blk,
        compiler_params=pltpu.CompilerParams(
            dimension_semantics=("parallel",),
        ),
    )(t2, p2)

    out_flat = out2.reshape(-1)
    if padded != n:
        out_flat = out_flat[:n]
    return out_flat.reshape(orig_shape)


def _ref_hardshrink(target, pred, beta):
    x = jnp.abs(target - pred)
    return jnp.where(jnp.logical_or(x > beta, x < -beta), x, jnp.zeros_like(x))


if __name__ == "__main__":
    key = jax.random.PRNGKey(0)
    k1, k2, k3, k4 = jax.random.split(key, 4)
    beta = 0.01

    # Small NCHW-style shapes: batch=2, channels=4, spatial=16x16
    shape = (2, 4, 16, 16)
    target = jax.random.normal(k1, shape, dtype=jnp.float32) * 0.05
    pred = jax.random.normal(k2, shape, dtype=jnp.float32) * 0.05

    out = hardshrink_loss(target, pred, beta=beta)
    out = jax.block_until_ready(out)

    ref = _ref_hardshrink(target, pred, beta)
    assert out.shape == shape
    assert out.dtype == jnp.float32
    assert jnp.allclose(out, ref, atol=1e-6, rtol=1e-6)

    # Uneven shape to exercise the tail-padding path.
    shape2 = (3, 5, 7, 11)
    t2 = jax.random.normal(k3, shape2, dtype=jnp.float32) * 0.05
    p2 = jax.random.normal(k4, shape2, dtype=jnp.float32) * 0.05
    out2 = jax.block_until_ready(hardshrink_loss(t2, p2, beta=beta))
    assert out2.shape == shape2
    assert jnp.allclose(out2, _ref_hardshrink(t2, p2, beta), atol=1e-6, rtol=1e-6)

    print("KERNEL_OK")
</pallas_src>

<mosaic_0001>
module attributes {stable_mosaic.version = 11 : i64} {
  func.func @_hardshrink_kernel(%arg0: i32, %arg1: memref<4x512xf32, #tpu.memory_space<vmem>>, %arg2: memref<4x512xf32, #tpu.memory_space<vmem>>, %arg3: memref<4x512xf32, #tpu.memory_space<vmem>>) attributes {dimension_semantics = [#tpu.dimension_semantics<parallel>], iteration_bounds = array<i64: 1>, scalar_prefetch = 0 : i64, scratch_operands = 0 : i64, tpu.core_type = #tpu.core_type<tc>, window_params = [{transform_indices = @transform_0, window_bounds = array<i64: 4, 512>}, {transform_indices = @transform_1, window_bounds = array<i64: 4, 512>}, {transform_indices = @transform_2, window_bounds = array<i64: 4, 512>}]} {
    %c0 = arith.constant 0 : index
    %c0_0 = arith.constant 0 : index
    %0 = vector.load %arg1[%c0, %c0_0] : memref<4x512xf32, #tpu.memory_space<vmem>>, vector<4x512xf32>
    %c0_1 = arith.constant 0 : index
    %c0_2 = arith.constant 0 : index
    %1 = vector.load %arg2[%c0_1, %c0_2] : memref<4x512xf32, #tpu.memory_space<vmem>>, vector<4x512xf32>
    %2 = arith.subf %0, %1 : vector<4x512xf32>
    %3 = math.absf %2 : vector<4x512xf32>
    %cst = arith.constant 0.00999999977 : f32
    %4 = vector.broadcast %cst : f32 to vector<4x512xf32>
    %5 = arith.cmpf ogt, %3, %4 : vector<4x512xf32>
    %cst_3 = arith.constant -0.00999999977 : f32
    %6 = vector.broadcast %cst_3 : f32 to vector<4x512xf32>
    %7 = arith.cmpf olt, %3, %6 : vector<4x512xf32>
    %8 = arith.ori %5, %7 : vector<4x512xi1>
    %cst_4 = arith.constant 0.000000e+00 : f32
    %9 = vector.broadcast %cst_4 : f32 to vector<4x512xf32>
    %10 = arith.select %8, %3, %9 : vector<4x512xi1>, vector<4x512xf32>
    %c0_5 = arith.constant 0 : index
    %c0_6 = arith.constant 0 : index
    %11 = vector.load %arg3[%c0_5, %c0_6] : memref<4x512xf32, #tpu.memory_space<vmem>>, vector<4x512xf32>
    tpu.vector_store %arg3[%c0_5, %c0_6], %10 {strides = array<i32>} : memref<4x512xf32, #tpu.memory_space<vmem>>, vector<4x512xf32>,
    return
  }
  func.func @transform_0(%arg0: i32) -> (i32, i32) {
    %c0_i32 = arith.constant 0 : i32
    %c0_i32_0 = arith.constant 0 : i32
    return %arg0, %c0_i32 : i32, i32
  }
  func.func @transform_1(%arg0: i32) -> (i32, i32) {
    %c0_i32 = arith.constant 0 : i32
    %c0_i32_0 = arith.constant 0 : i32
    return %arg0, %c0_i32 : i32, i32
  }
  func.func @transform_2(%arg0: i32) -> (i32, i32) {
    %c0_i32 = arith.constant 0 : i32
    %c0_i32_0 = arith.constant 0 : i32
    return %arg0, %c0_i32 : i32, i32
  }
}

</mosaic_0001>

<llo_original>
// kernel: tpu_custom_call.1
$region0: #{tpu_custom_call.1}
  #allocation0 [shape = 'u32[]', space=smem, size = 0x4, offset = 0x4, fixed_abs, tag = 'smem constant byte address 0x4 - core index']
  #allocation1 [shape = 'u32[144,128]{1,0:T(1,128)}', space=vmem, size = 0x12000, scoped, tag = 'internal scratch']
  %s0 = inlined_call_operand.hbm [shape: f32[4,512], index: 0, kind: input, shape index: {}]
  %s1 = inlined_call_operand.hbm [shape: f32[4,512], index: 1, kind: input, shape index: {}]
  %s2 = inlined_call_operand.hbm [shape: f32[4,512], index: 2, kind: output, shape index: {}]
  %s3 = sld [smem:[#allocation0]]
  $region26: #{tpu_custom_call.1} parent=0
    _
  %s5 = ssub.s32 1, %s3
  %s6 = scalar_select 0, %s5, %s3
  $region1: #{tpu_custom_call.1} parent=0
    #allocation2 [shape = 'u8[8192]{0}', space=vmem, size = 0x2000, scoped, tag = 'input window, operand 0, single buffered']
    #allocation3 [shape = 's32[1]{0}', space=sflag, size = 0x4, scoped, tag = 'scoped memory for tpu_custom_call.1']
    #allocation4 [shape = 's32[1]{0}', space=sflag, size = 0x4, scoped, tag = 'scoped memory for tpu_custom_call.1']
    #allocation5 [shape = 'u8[8192]{0}', space=vmem, size = 0x2000, scoped, tag = 'input window, operand 1, single buffered']
    #allocation6 [shape = 's32[1]{0}', space=sflag, size = 0x4, scoped, tag = 'scoped memory for tpu_custom_call.1']
    #allocation7 [shape = 'u8[8192]{0}', space=vmem, size = 0x2000, scoped, tag = 'output window, operand 0, single buffered']
    %7 = vsyncpa [#allocation3], 0
    %8 = vsyncpa [#allocation6], 0
    %9 = vsyncpa [#allocation4], 0
    // Predicated region
    $region2: #{tpu_custom_call.1} parent=1 // pred_check
      _
    $region3: #{tpu_custom_call.1} parent=1 // pred_check_branch
      %11 = sbr.rel (0) target = $region5
    $region4: #{tpu_custom_call.1} parent=1 // pred_region
      %s13 = ssub.s32 256, 256
      %14 = vsyncadd [#allocation3], %s13
      %s16 = sshll.u32 [#allocation2], 4
      %s17 = int_to_ptr.vmem [resolvable:$true] %s16
      %19 = dma.hbm_to_vmem [thread:$0]  %s0, 256, %s17, [#allocation3]
    $region5: #{tpu_custom_call.1} parent=1 // pred_fallthru
      _
    // Predicated region
    $region6: #{tpu_custom_call.1} parent=1 // pred_check
      _
    $region7: #{tpu_custom_call.1} parent=1 // pred_check_branch
      %21 = sbr.rel (0) target = $region9
    $region8: #{tpu_custom_call.1} parent=1 // pred_region
      %s23 = ssub.s32 256, 256
      %24 = vsyncadd [#allocation6], %s23
      %s26 = sshll.u32 [#allocation5], 4
      %s27 = int_to_ptr.vmem [resolvable:$true] %s26
      %29 = dma.hbm_to_vmem [thread:$0]  %s1, 256, %s27, [#allocation6]
    $region9: #{tpu_custom_call.1} parent=1 // pred_fallthru
      _
    // Predicated region
    $region10: #{tpu_custom_call.1} parent=1 // pred_check
      _
    $region11: #{tpu_custom_call.1} parent=1 // pred_check_branch
      %31 = sbr.rel (0) target = $region13
    $region12: #{tpu_custom_call.1} parent=1 // pred_region
      %32 = dma.done [#allocation3], 256
    $region13: #{tpu_custom_call.1} parent=1 // pred_fallthru
      _
    // Predicated region
    $region14: #{tpu_custom_call.1} parent=1 // pred_check
      _
    $region15: #{tpu_custom_call.1} parent=1 // pred_check_branch
      %34 = sbr.rel (0) target = $region17
    $region16: #{tpu_custom_call.1} parent=1 // pred_region
      %35 = dma.done [#allocation6], 256
    $region17: #{tpu_custom_call.1} parent=1 // pred_fallthru
      _
    %v36 = vld [vmem:[#allocation2] sm:$0xff]
    %v37 = vld [vmem:[#allocation2 + $0x8] sm:$0xff]
    %v38 = vld [vmem:[#allocation5] sm:$0xff]
    %v39 = vld [vmem:[#allocation5 + $0x8] sm:$0xff]
    %v40 = vsub.f32 %v36, %v38
    %v41 = vsub.f32 %v37, %v39
    %v42 = vand.u32 2147483647, %v40
    %v43 = vand.u32 2147483647, %v41
    %vm44 = vcmp.gt.f32.partialorder %v42, 0.01
    %vm45 = vcmp.gt.f32.partialorder %v43, 0.01
    %vm46 = vcmp.lt.f32.partialorder %v42, -0.01
    %vm47 = vcmp.lt.f32.partialorder %v43, -0.01
    %vm48 = vmor %vm44, %vm46
    %vm49 = vmor %vm45, %vm47
    %v50 = vsel %vm48, %v42, 0.0
    %v51 = vsel %vm49, %v43, 0.0
    %52 = vst [vmem:[#allocation7] sm:$0xff] %v50
    %53 = vst [vmem:[#allocation7 + $0x8] sm:$0xff] %v51
    // Predicated region
    $region18: #{tpu_custom_call.1} parent=1 // pred_check
      _
    $region19: #{tpu_custom_call.1} parent=1 // pred_check_branch
      %55 = sbr.rel (0) target = $region21
    $region20: #{tpu_custom_call.1} parent=1 // pred_region
      %s57 = ssub.s32 256, 256
      %58 = vsyncadd [#allocation4], %s57
      %s60 = sshll.u32 [#allocation7], 4
      %s61 = int_to_ptr.vmem [resolvable:$true] %s60
      %63 = dma.vmem_to_hbm [thread:$0]  %s61, 256, %s2, [#allocation4]
    $region21: #{tpu_custom_call.1} parent=1 // pred_fallthru
      _
    // Predicated region
    $region22: #{tpu_custom_call.1} parent=1 // pred_check
      _
    $region23: #{tpu_custom_call.1} parent=1 // pred_check_branch
      %65 = sbr.rel (0) target = $region25
    $region24: #{tpu_custom_call.1} parent=1 // pred_region
      %66 = dma.done [#allocation4], 256
    $region25: #{tpu_custom_call.1} parent=1 // pred_fallthru
      _
    %67 = vsyncpa [#allocation3], 1
    %68 = vsyncpa [#allocation6], 1
    %69 = vsyncpa [#allocation4], 1

</llo_original>
